<compile_context>
chip_gen: v7x
topology: tpu7x:2x2x1
jax: 0.10.0
libtpu: 0.0.40
codegen_flags: <defaults>
</compile_context>

<pallas_src>
import functools

import jax
import jax.numpy as jnp
from jax.experimental import pallas as pl
from jax.experimental.pallas import tpu as pltpu

_EPS = 1e-8
_LANES = 128
_SUBLANES = 8


def _round_up(x, m):
    return (x + m - 1) // m * m


def _num_tensorcores():
    """Best-effort TensorCore count per chip for the outer 'parallel' axis.

    Falls back to 2: on single-core parts the extra row-range chunk costs at
    most one masked grid step and one extra (8,128) output block, while on
    dual-core parts (e.g. v7x) it lets both cores' HBM paths stream.
    """
    try:
        info = pltpu.get_tpu_info()
        for name in ("num_tensorcores", "tensorcore_count", "num_cores",
                     "num_cores_per_chip", "core_count"):
            v = getattr(info, name, None)
            if isinstance(v, int) and v > 0:
                return max(1, min(v, 4))
    except Exception:
        pass
    try:
        v = getattr(jax.devices()[0], "num_cores", None)
        if isinstance(v, int) and v > 0:
            return max(1, min(v, 4))
    except Exception:
        pass
    return 2


def _wmape_kernel(yp_ref, yt_ref, out_ref, *, rows_valid, n_inner, tile_rows,
                  strip_rows):
    """Weighted-error sum over one (tile_rows, 128) tile into a (1,8,128) block."""
    o = pl.program_id(0)
    i = pl.program_id(1)

    # Output block is revisited across the inner (reduction) axis -> acts as a
    # VMEM-resident accumulator.  Zero it on the first inner step.
    @pl.when(i == 0)
    def _():
        out_ref[...] = jnp.zeros_like(out_ref)

    tile_idx = o * n_inner + i
    # Rows of this (logical) tile holding real data: <= 0 for phantom slots
    # (clamped index_map), < tile_rows only for the single boundary tile.
    row_limit = rows_valid - tile_idx * tile_rows
    n_strips = tile_rows // strip_rows

    def tile_sum(masked):
        def body(s, acc):
            r0 = pl.multiple_of(s * strip_rows, strip_rows)
            yt = yt_ref[pl.ds(r0, strip_rows), :].astype(jnp.float32)
            yp = yp_ref[pl.ds(r0, strip_rows), :].astype(jnp.float32)
            # |yt - yp| / |yt + eps| * (|yt| + eps): divide as EUP reciprocal
            # (exact variant keeps the 1e-5 tolerance) + VPU multiplies.
            inv = pl.reciprocal(jnp.abs(yt + _EPS), approx=False)
            w = jnp.abs(yt - yp) * inv * (jnp.abs(yt) + _EPS)
            if masked:
                rows = jax.lax.broadcasted_iota(
                    jnp.int32, (strip_rows, _LANES), 0)
                w = jnp.where(rows < row_limit - r0, w, 0.0)
            # Sublane-aligned partial sum (pure VALU adds); the cross-lane
            # collapse happens once in the wrapper on a tiny array.
            return acc + w.reshape(
                strip_rows // _SUBLANES, _SUBLANES, _LANES).sum(axis=0)

        acc0 = jnp.zeros((_SUBLANES, _LANES), jnp.float32)
        unroll = True if n_strips <= 8 else 8
        return jax.lax.fori_loop(0, n_strips, body, acc0, unroll=unroll)

    # Fast path: tile fully in-range -> no per-element mask work at all.
    @pl.when(row_limit >= tile_rows)
    def _():
        out_ref[...] += tile_sum(masked=False)[None]

    # Slow path: boundary tile / phantom slot -> row-granular masking.
    @pl.when(row_limit < tile_rows)
    def _():
        out_ref[...] += tile_sum(masked=True)[None]


def _weighted_error_sum(yp, yt):
    """Plain-JAX sum of weighted errors (ragged tail / tiny-input fallback)."""
    yp = yp.astype(jnp.float32)
    yt = yt.astype(jnp.float32)
    return jnp.sum(jnp.abs((yt - yp) / (yt + _EPS)) * (jnp.abs(yt) + _EPS))


def weighted_mape(y_pred, y_true, *, tile_bytes=2 << 20, num_chunks=None):
    """WMAPE = mean(|(yt - yp)/(yt + eps)| * (|yt| + eps)) as a scalar f32."""
    assert y_pred.shape == y_true.shape, (y_pred.shape, y_true.shape)
    n = y_pred.size
    if n == 0:
        return jnp.float32(jnp.nan)

    itemsize = jnp.dtype(y_pred.dtype).itemsize
    # Native sublane packing of the input dtype: f32 -> 8 rows, bf16 -> 16,
    # int8/fp8 -> 32.  Keeping tile_rows a multiple of this avoids forced
    # layout padding for sub-32-bit inputs.
    align_rows = max(_SUBLANES, _SUBLANES * 4 // max(1, min(4, itemsize)))
    row_unit = align_rows * _LANES

    flat_p = y_pred.reshape(-1)
    flat_t = y_true.reshape(-1)

    n_main = (n // row_unit) * row_unit
    if n_main == 0:
        # Smaller than one aligned row-group: plain JAX is already optimal.
        return (_weighted_error_sum(flat_p, flat_t)
                / jnp.float32(n)).astype(jnp.float32)

    rows_main = n_main // _LANES                  # multiple of align_rows
    if n_main == n:
        yp2 = flat_p.reshape(rows_main, _LANES)   # bitcast reshape, no copy
        yt2 = flat_t.reshape(rows_main, _LANES)
        tail_sum = None
    else:
        # Ragged tail (< align_rows*128 elements): summed in plain JAX below
        # instead of jnp.pad-ing (Pad would rematerialize both full tensors).
        yp2 = flat_p[:n_main].reshape(rows_main, _LANES)
        yt2 = flat_t[:n_main].reshape(rows_main, _LANES)
        tail_sum = _weighted_error_sum(flat_p[n_main:], flat_t[n_main:])

    # ~tile_bytes per input per grid step (default 2 MiB -> 2 inputs x 2
    # pipeline buffers = 8 MiB VMEM): big enough to amortise the ~0.35 us
    # per-step overhead, small enough for v5e's 16 MiB scoped-VMEM default
    # and v7x's 64 MiB physical VMEM.
    tile_rows = min(rows_main, max(align_rows, tile_bytes // (_LANES * itemsize)))
    tile_rows = _round_up(tile_rows, align_rows)  # still <= rows_main

    # Strip size for the in-kernel reduction loop (bounds vreg pressure while
    # the DMA tile stays large); must divide tile_rows and be sublane-aligned.
    strip_rows = min(tile_rows, 512)
    while tile_rows % strip_rows:
        strip_rows -= align_rows

    n_tiles = pl.cdiv(rows_main, tile_rows)
    if num_chunks is None:
        num_chunks = _num_tensorcores()
    n_outer = max(1, min(num_chunks, n_tiles))    # row-range chunks
    n_inner = pl.cdiv(n_tiles, n_outer)

    def in_map(o, i):
        # Phantom slots in the last chunk clamp onto the final real tile;
        # their rows fail the in-kernel row_limit test and contribute zero.
        t = jnp.minimum(o * n_inner + i, n_tiles - 1)
        return (t, 0)

    kernel = functools.partial(
        _wmape_kernel, rows_valid=rows_main, n_inner=n_inner,
        tile_rows=tile_rows, strip_rows=strip_rows)

    cost = pl.CostEstimate(
        flops=7 * n,
        transcendentals=n,                        # reciprocal on the EUP
        bytes_accessed=2 * n * itemsize + n_outer * _SUBLANES * _LANES * 4)

    partials = pl.pallas_call(
        kernel,
        out_shape=jax.ShapeDtypeStruct((n_outer, _SUBLANES, _LANES), jnp.float32),
        grid_spec=pltpu.PrefetchScalarGridSpec(
            num_scalar_prefetch=0,
            grid=(n_outer, n_inner),
            in_specs=[
                pl.BlockSpec((tile_rows, _LANES), in_map),
                pl.BlockSpec((tile_rows, _LANES), in_map),
            ],
            out_specs=pl.BlockSpec((1, _SUBLANES, _LANES), lambda o, i: (o, 0, 0)),
        ),
        compiler_params=pltpu.CompilerParams(
            dimension_semantics=("parallel", "arbitrary")),
        cost_estimate=cost,
    )(yp2, yt2)

    total = jnp.sum(partials)
    if tail_sum is not None:
        total = total + tail_sum
    return (total / jnp.float32(n)).astype(jnp.float32)


def _reference(y_pred, y_true):
    y_pred = y_pred.astype(jnp.float32)
    y_true = y_true.astype(jnp.float32)
    ape = jnp.abs((y_true - y_pred) / (y_true + _EPS))
    return jnp.mean(ape * (jnp.abs(y_true) + _EPS))


if __name__ == "__main__":
    key = jax.random.PRNGKey(0)
    k = jax.random.split(key, 4)

    # 1) Module-scale input (NCHW, matching the PyTorch convention).
    shape = (2, 4, 16, 16)
    y_pred = jax.random.normal(k[0], shape, dtype=jnp.float32)
    y_true = jax.random.normal(k[1], shape, dtype=jnp.float32)
    out = weighted_mape(y_pred, y_true)
    jax.block_until_ready(out)
    ref = _reference(y_pred, y_true)
    assert jnp.allclose(out, ref, rtol=1e-5, atol=1e-6), (out, ref)

    # 2) bf16 inputs (exercises the 16-row sublane-alignment path).
    yp_bf = y_pred.astype(jnp.bfloat16)
    yt_bf = y_true.astype(jnp.bfloat16)
    out_bf = weighted_mape(yp_bf, yt_bf)
    jax.block_until_ready(out_bf)
    ref_bf = _reference(yp_bf, yt_bf)
    assert jnp.allclose(out_bf, ref_bf, rtol=1e-4, atol=1e-6), (out_bf, ref_bf)

    # 3) Multi-tile walk: full tiles (fast path), a partial boundary tile and
    #    a phantom grid slot (num_chunks=2), plus a ragged tail in the wrapper.
    shape2 = (2, 3, 567, 311)                     # 1,058,022 elements
    yp2 = jax.random.normal(k[2], shape2, dtype=jnp.float32)
    yt2 = jax.random.normal(k[3], shape2, dtype=jnp.float32)
    out2 = weighted_mape(yp2, yt2, num_chunks=2)
    jax.block_until_ready(out2)
    ref2 = _reference(yp2, yt2)
    assert jnp.allclose(out2, ref2, rtol=1e-4, atol=1e-6), (out2, ref2)

    print("KERNEL_OK")
</pallas_src>

<mosaic_0001>
module attributes {stable_mosaic.version = 11 : i64} {
  func.func @_wmape_kernel(%arg0: i32, %arg1: i32, %arg2: memref<16x128xf32, #tpu.memory_space<vmem>>, %arg3: memref<16x128xf32, #tpu.memory_space<vmem>>, %arg4: memref<1x8x128xf32, #tpu.memory_space<vmem>>) attributes {dimension_semantics = [#tpu.dimension_semantics<parallel>, #tpu.dimension_semantics<arbitrary>], iteration_bounds = array<i64: 1, 1>, scalar_prefetch = 0 : i64, scratch_operands = 0 : i64, tpu.core_type = #tpu.core_type<tc>, window_params = [{transform_indices = @transform_0, window_bounds = array<i64: 16, 128>}, {transform_indices = @transform_1, window_bounds = array<i64: 16, 128>}, {transform_indices = @transform_2, window_bounds = array<i64: 1, 8, 128>}]} {
    %c0_i32 = arith.constant 0 : i32
    %0 = arith.cmpi eq, %arg1, %c0_i32 : i32
    %1 = arith.extui %0 : i1 to i32
    %c0_i32_0 = arith.constant 0 : i32
    %2 = arith.cmpi ne, %1, %c0_i32_0 : i32
    scf.if %2 {
      %cst = arith.constant 0.000000e+00 : f32
      %13 = vector.broadcast %cst : f32 to vector<1x8x128xf32>
      %c0 = arith.constant 0 : index
      %c0_6 = arith.constant 0 : index
      %c0_7 = arith.constant 0 : index
      %14 = vector.load %arg4[%c0, %c0_6, %c0_7] : memref<1x8x128xf32, #tpu.memory_space<vmem>>, vector<1x8x128xf32>
      tpu.vector_store %arg4[%c0, %c0_6, %c0_7], %13 {strides = array<i32>} : memref<1x8x128xf32, #tpu.memory_space<vmem>>, vector<1x8x128xf32>,
    } else {
    }
    %c1_i32 = arith.constant 1 : i32
    %3 = arith.muli %arg0, %c1_i32 : i32
    %4 = arith.addi %3, %arg1 : i32
    %c16_i32 = arith.constant 16 : i32
    %5 = arith.muli %4, %c16_i32 : i32
    %c16_i32_1 = arith.constant 16 : i32
    %6 = arith.subi %c16_i32_1, %5 : i32
    %c16_i32_2 = arith.constant 16 : i32
    %7 = arith.cmpi sge, %6, %c16_i32_2 : i32
    %8 = arith.extui %7 : i1 to i32
    %c0_i32_3 = arith.constant 0 : i32
    %9 = arith.cmpi ne, %8, %c0_i32_3 : i32
    scf.if %9 {
      %c0 = arith.constant 0 : index
      %c0_6 = arith.constant 0 : index
      %c0_7 = arith.constant 0 : index
      %13 = vector.load %arg4[%c0, %c0_6, %c0_7] : memref<1x8x128xf32, #tpu.memory_space<vmem>>, vector<1x8x128xf32>
      %cst = arith.constant 0.000000e+00 : f32
      %14 = vector.broadcast %cst : f32 to vector<8x128xf32>
      %c0_i32_8 = arith.constant 0 : i32
      %c16_i32_9 = arith.constant 16 : i32
      %15 = arith.muli %c0_i32_8, %c16_i32_9 : i32
      %16 = tpu.assume_multiple %15, 16 : i32
      %17 = arith.index_cast %16 : i32 to index
      %c0_10 = arith.constant 0 : index
      %18 = vector.load %arg3[%17, %c0_10] : memref<16x128xf32, #tpu.memory_space<vmem>>, vector<16x128xf32>
      %19 = arith.index_cast %16 : i32 to index
      %c0_11 = arith.constant 0 : index
      %20 = vector.load %arg2[%19, %c0_11] : memref<16x128xf32, #tpu.memory_space<vmem>>, vector<16x128xf32>
      %cst_12 = arith.constant 9.99999993E-9 : f32
      %21 = vector.broadcast %cst_12 : f32 to vector<16x128xf32>
      %22 = arith.addf %18, %21 : vector<16x128xf32>
      %23 = math.absf %22 : vector<16x128xf32>
      %24 = tpu.reciprocal %23 : vector<16x128xf32> -> vector<16x128xf32>
      %25 = arith.subf %18, %20 : vector<16x128xf32>
      %26 = math.absf %25 : vector<16x128xf32>
      %27 = arith.mulf %26, %24 : vector<16x128xf32>
      %28 = math.absf %18 : vector<16x128xf32>
      %cst_13 = arith.constant 9.99999993E-9 : f32
      %29 = vector.broadcast %cst_13 : f32 to vector<16x128xf32>
      %30 = arith.addf %28, %29 : vector<16x128xf32>
      %31 = arith.mulf %27, %30 : vector<16x128xf32>
      %32 = vector.shape_cast %31 : vector<16x128xf32> to vector<2x8x128xf32>
      %cst_14 = arith.constant dense<0.000000e+00> : vector<8x128xf32>
      %33 = vector.multi_reduction <add>, %32, %cst_14 [0] : vector<2x8x128xf32> to vector<8x128xf32>
      %34 = arith.addf %14, %33 : vector<8x128xf32>
      %c1_i32_15 = arith.constant 1 : i32
      %35 = vector.shape_cast %34 : vector<8x128xf32> to vector<1x8x128xf32>
      %36 = arith.addf %13, %35 : vector<1x8x128xf32>
      %c0_16 = arith.constant 0 : index
      %c0_17 = arith.constant 0 : index
      %c0_18 = arith.constant 0 : index
      %37 = vector.load %arg4[%c0_16, %c0_17, %c0_18] : memref<1x8x128xf32, #tpu.memory_space<vmem>>, vector<1x8x128xf32>
      tpu.vector_store %arg4[%c0_16, %c0_17, %c0_18], %36 {strides = array<i32>} : memref<1x8x128xf32, #tpu.memory_space<vmem>>, vector<1x8x128xf32>,
    } else {
    }
    %c16_i32_4 = arith.constant 16 : i32
    %10 = arith.cmpi slt, %6, %c16_i32_4 : i32
    %11 = arith.extui %10 : i1 to i32
    %c0_i32_5 = arith.constant 0 : i32
    %12 = arith.cmpi ne, %11, %c0_i32_5 : i32
    scf.if %12 {
      %c0 = arith.constant 0 : index
      %c0_6 = arith.constant 0 : index
      %c0_7 = arith.constant 0 : index
      %13 = vector.load %arg4[%c0, %c0_6, %c0_7] : memref<1x8x128xf32, #tpu.memory_space<vmem>>, vector<1x8x128xf32>
      %cst = arith.constant 0.000000e+00 : f32
      %14 = vector.broadcast %cst : f32 to vector<8x128xf32>
      %c0_i32_8 = arith.constant 0 : i32
      %c16_i32_9 = arith.constant 16 : i32
      %15 = arith.muli %c0_i32_8, %c16_i32_9 : i32
      %16 = tpu.assume_multiple %15, 16 : i32
      %17 = arith.index_cast %16 : i32 to index
      %c0_10 = arith.constant 0 : index
      %18 = vector.load %arg3[%17, %c0_10] : memref<16x128xf32, #tpu.memory_space<vmem>>, vector<16x128xf32>
      %19 = arith.index_cast %16 : i32 to index
      %c0_11 = arith.constant 0 : index
      %20 = vector.load %arg2[%19, %c0_11] : memref<16x128xf32, #tpu.memory_space<vmem>>, vector<16x128xf32>
      %cst_12 = arith.constant 9.99999993E-9 : f32
      %21 = vector.broadcast %cst_12 : f32 to vector<16x128xf32>
      %22 = arith.addf %18, %21 : vector<16x128xf32>
      %23 = math.absf %22 : vector<16x128xf32>
      %24 = tpu.reciprocal %23 : vector<16x128xf32> -> vector<16x128xf32>
      %25 = arith.subf %18, %20 : vector<16x128xf32>
      %26 = math.absf %25 : vector<16x128xf32>
      %27 = arith.mulf %26, %24 : vector<16x128xf32>
      %28 = math.absf %18 : vector<16x128xf32>
      %cst_13 = arith.constant 9.99999993E-9 : f32
      %29 = vector.broadcast %cst_13 : f32 to vector<16x128xf32>
      %30 = arith.addf %28, %29 : vector<16x128xf32>
      %31 = arith.mulf %27, %30 : vector<16x128xf32>
      %32 = tpu.iota {dimensions = array<i32: 0>} : vector<16x128xi32>
      %33 = arith.subi %6, %16 : i32
      %34 = vector.broadcast %33 : i32 to vector<16x128xi32>
      %35 = arith.cmpi slt, %32, %34 : vector<16x128xi32>
      %cst_14 = arith.constant 0.000000e+00 : f32
      %36 = vector.broadcast %cst_14 : f32 to vector<16x128xf32>
      %37 = arith.select %35, %31, %36 : vector<16x128xi1>, vector<16x128xf32>
      %38 = vector.shape_cast %37 : vector<16x128xf32> to vector<2x8x128xf32>
      %cst_15 = arith.constant dense<0.000000e+00> : vector<8x128xf32>
      %39 = vector.multi_reduction <add>, %38, %cst_15 [0] : vector<2x8x128xf32> to vector<8x128xf32>
      %40 = arith.addf %14, %39 : vector<8x128xf32>
      %c1_i32_16 = arith.constant 1 : i32
      %41 = vector.shape_cast %40 : vector<8x128xf32> to vector<1x8x128xf32>
      %42 = arith.addf %13, %41 : vector<1x8x128xf32>
      %c0_17 = arith.constant 0 : index
      %c0_18 = arith.constant 0 : index
      %c0_19 = arith.constant 0 : index
      %43 = vector.load %arg4[%c0_17, %c0_18, %c0_19] : memref<1x8x128xf32, #tpu.memory_space<vmem>>, vector<1x8x128xf32>
      tpu.vector_store %arg4[%c0_17, %c0_18, %c0_19], %42 {strides = array<i32>} : memref<1x8x128xf32, #tpu.memory_space<vmem>>, vector<1x8x128xf32>,
    } else {
    }
    return
  }
  func.func @transform_0(%arg0: i32, %arg1: i32) -> (i32, i32) {
    %c1_i32 = arith.constant 1 : i32
    %0 = arith.muli %arg0, %c1_i32 : i32
    %1 = arith.addi %0, %arg1 : i32
    %c0_i32 = arith.constant 0 : i32
    %2 = arith.minsi %1, %c0_i32 : i32
    %c0_i32_0 = arith.constant 0 : i32
    %c0_i32_1 = arith.constant 0 : i32
    return %2, %c0_i32_0 : i32, i32
  }
  func.func @transform_1(%arg0: i32, %arg1: i32) -> (i32, i32) {
    %c1_i32 = arith.constant 1 : i32
    %0 = arith.muli %arg0, %c1_i32 : i32
    %1 = arith.addi %0, %arg1 : i32
    %c0_i32 = arith.constant 0 : i32
    %2 = arith.minsi %1, %c0_i32 : i32
    %c0_i32_0 = arith.constant 0 : i32
    %c0_i32_1 = arith.constant 0 : i32
    return %2, %c0_i32_0 : i32, i32
  }
  func.func @transform_2(%arg0: i32, %arg1: i32) -> (i32, i32, i32) {
    %c0_i32 = arith.constant 0 : i32
    %c0_i32_0 = arith.constant 0 : i32
    %c0_i32_1 = arith.constant 0 : i32
    return %arg0, %c0_i32, %c0_i32_0 : i32, i32, i32
  }
}

</mosaic_0001>

<llo_original>
// kernel: tpu_custom_call.1
$region0: #{tpu_custom_call.1}
  #allocation0 [shape = 'u32[]', space=smem, size = 0x4, offset = 0x4, fixed_abs, tag = 'smem constant byte address 0x4 - core index']
  #allocation1 [shape = 'u32[144,128]{1,0:T(1,128)}', space=vmem, size = 0x12000, scoped, tag = 'internal scratch']
  %s0 = inlined_call_operand.hbm [shape: f32[16,128], index: 0, kind: input, shape index: {}]
  %s1 = inlined_call_operand.hbm [shape: f32[16,128], index: 1, kind: input, shape index: {}]
  %s2 = inlined_call_operand.hbm [shape: f32[1,8,128], index: 2, kind: output, shape index: {}]
  %s3 = sld [smem:[#allocation0]]
  $region38: #{tpu_custom_call.1} parent=0
    _
  %s5 = ssub.s32 1, %s3
  %s6 = scalar_select 0, %s5, %s3
  $region1: #{tpu_custom_call.1} parent=0
    #allocation2 [shape = 'u8[8192]{0}', space=vmem, size = 0x2000, scoped, tag = 'input window, operand 0, single buffered']
    #allocation3 [shape = 's32[1]{0}', space=sflag, size = 0x4, scoped, tag = 'scoped memory for tpu_custom_call.1']
    #allocation4 [shape = 's32[1]{0}', space=sflag, size = 0x4, scoped, tag = 'scoped memory for tpu_custom_call.1']
    #allocation5 [shape = 'u8[8192]{0}', space=vmem, size = 0x2000, scoped, tag = 'input window, operand 1, single buffered']
    #allocation6 [shape = 's32[1]{0}', space=sflag, size = 0x4, scoped, tag = 'scoped memory for tpu_custom_call.1']
    #allocation7 [shape = 'u8[4096]{0}', space=vmem, size = 0x1000, scoped, tag = 'output window, operand 0, single buffered']
    %7 = vsyncpa [#allocation3], 0
    %8 = vsyncpa [#allocation6], 0
    %9 = vsyncpa [#allocation4], 0
    // Predicated region
    $region2: #{tpu_custom_call.1} parent=1 // pred_check
      _
    $region3: #{tpu_custom_call.1} parent=1 // pred_check_branch
      %11 = sbr.rel (0) target = $region5
    $region4: #{tpu_custom_call.1} parent=1 // pred_region
      %s12 = sadd.s32 0, 0
      %p13 = scmp.lt.s32.totalorder %s12, 0
      %s14 = scalar_select %p13, %s12, 0
      %s15 = smul.u32 2, %s14
      %s17 = ssub.s32 256, 256
      %18 = vsyncadd [#allocation3], %s17
      %s19 = smul.addr %s15, 128
      %s20 = scalar_lea.hbm %s0, %s19
      %s21 = sshll.u32 [#allocation2], 4
      %s22 = int_to_ptr.vmem [resolvable:$true] %s21
      %27 = dma.hbm_to_vmem [thread:$0]  %s20, 256, %s22, [#allocation3], 128, 128, 8
    $region5: #{tpu_custom_call.1} parent=1 // pred_fallthru
      _
    // Predicated region
    $region6: #{tpu_custom_call.1} parent=1 // pred_check
      _
    $region7: #{tpu_custom_call.1} parent=1 // pred_check_branch
      %29 = sbr.rel (0) target = $region9
    $region8: #{tpu_custom_call.1} parent=1 // pred_region
      %s30 = sadd.s32 0, 0
      %p31 = scmp.lt.s32.totalorder %s30, 0
      %s32 = scalar_select %p31, %s30, 0
      %s33 = smul.u32 2, %s32
      %s35 = ssub.s32 256, 256
      %36 = vsyncadd [#allocation6], %s35
      %s37 = smul.addr %s33, 128
      %s38 = scalar_lea.hbm %s1, %s37
      %s39 = sshll.u32 [#allocation5], 4
      %s40 = int_to_ptr.vmem [resolvable:$true] %s39
      %45 = dma.hbm_to_vmem [thread:$0]  %s38, 256, %s40, [#allocation6], 128, 128, 8
    $region9: #{tpu_custom_call.1} parent=1 // pred_fallthru
      _
    // Predicated region
    $region10: #{tpu_custom_call.1} parent=1 // pred_check
      _
    $region11: #{tpu_custom_call.1} parent=1 // pred_check_branch
      %47 = sbr.rel (0) target = $region13
    $region12: #{tpu_custom_call.1} parent=1 // pred_region
      %48 = dma.done [#allocation3], 256
    $region13: #{tpu_custom_call.1} parent=1 // pred_fallthru
      _
    // Predicated region
    $region14: #{tpu_custom_call.1} parent=1 // pred_check
      _
    $region15: #{tpu_custom_call.1} parent=1 // pred_check_branch
      %50 = sbr.rel (0) target = $region17
    $region16: #{tpu_custom_call.1} parent=1 // pred_region
      %51 = dma.done [#allocation6], 256
    $region17: #{tpu_custom_call.1} parent=1 // pred_fallthru
      _
    %s52 = sadd.s32 0, 0
    %p53 = scmp.lt.s32.totalorder %s52, 0
    %s54 = scalar_select %p53, %s52, 0
    %s55 = smul.u32 2, %s54
    %s56 = sadd.s32 0, 0
    %p57 = scmp.lt.s32.totalorder %s56, 0
    %s58 = scalar_select %p57, %s56, 0
    %s59 = smul.u32 2, %s58
    %p60 = scmp.eq.s32.totalorder 0, 0
    // Predicated region
    $region18: #{tpu_custom_call.1} parent=1 // pred_check
      %p61 = pneg %p60
    $region19: #{tpu_custom_call.1} parent=1 // pred_check_branch
      %63 = sbr.rel (%p61) target = $region21
    $region20: #{tpu_custom_call.1} parent=1 // pred_region
      %64 = vst [vmem:[#allocation7] sm:$0xff] 0.0
    $region21: #{tpu_custom_call.1} parent=1 // pred_fallthru
      _
    %s65 = sadd.s32 0, 0
    %s66 = smul.u32 %s65, 16
    %s67 = ssub.s32 16, %s66
    %p68 = scmp.ge.s32.totalorder %s67, 16
    // Predicated region
    $region22: #{tpu_custom_call.1} parent=1 // pred_check
      %p69 = pneg %p68
    $region23: #{tpu_custom_call.1} parent=1 // pred_check_branch
      %71 = sbr.rel (%p69) target = $region25
    $region24: #{tpu_custom_call.1} parent=1 // pred_region
      %v72 = vld [vmem:[#allocation7] sm:$0xff]
      %v73 = vld [vmem:[#allocation5] sm:$0xff]
      %v74 = vld [vmem:[#allocation5 + $0x8] sm:$0xff]
      %v75 = vld [vmem:[#allocation2] sm:$0xff]
      %v76 = vld [vmem:[#allocation2 + $0x8] sm:$0xff]
      %v77 = vadd.f32 %v73, 1e-08
      %v78 = vadd.f32 %v74, 1e-08
      %v79 = vand.u32 2147483647, %v77
      %v80 = vand.u32 2147483647, %v78
      %v81 = vrcp.pop %v79
      %v82 = vrcp.pop %v80
      %v83 = vsub.f32 %v73, %v75
      %v84 = vsub.f32 %v74, %v76
      %v85 = vand.u32 2147483647, %v83
      %v86 = vand.u32 2147483647, %v84
      %v87 = vmul.f32 %v85, %v81
      %v88 = vmul.f32 %v86, %v82
      %v89 = vand.u32 2147483647, %v73
      %v90 = vand.u32 2147483647, %v74
      %v91 = vadd.f32 %v89, 1e-08
      %v92 = vadd.f32 %v90, 1e-08
      %v93 = vmul.f32 %v87, %v91
      %v94 = vmul.f32 %v88, %v92
      %v95 = vadd.f32 %v93, %v94
      %v96 = vadd.f32 %v95, 0.0
      %v97 = vadd.f32 %v72, %v96
      %98 = vst [vmem:[#allocation7] sm:$0xff] %v97
    $region25: #{tpu_custom_call.1} parent=1 // pred_fallthru
      _
    %p99 = scmp.lt.s32.totalorder %s67, 16
    // Predicated region
    $region26: #{tpu_custom_call.1} parent=1 // pred_check
      %p100 = pneg %p99
    $region27: #{tpu_custom_call.1} parent=1 // pred_check_branch
      %102 = sbr.rel (%p100) target = $region29
    $region28: #{tpu_custom_call.1} parent=1 // pred_region
      %v103 = vld [vmem:[#allocation7] sm:$0xff]
      %v104 = vld [vmem:[#allocation5] sm:$0xff]
      %v105 = vld [vmem:[#allocation5 + $0x8] sm:$0xff]
      %v106 = vld [vmem:[#allocation2] sm:$0xff]
      %v107 = vld [vmem:[#allocation2 + $0x8] sm:$0xff]
      %v108 = vadd.f32 %v104, 1e-08
      %v109 = vadd.f32 %v105, 1e-08
      %v110 = vand.u32 2147483647, %v108
      %v111 = vand.u32 2147483647, %v109
      %v112 = vrcp.pop %v110
      %v113 = vrcp.pop %v111
      %v114 = vsub.f32 %v104, %v106
      %v115 = vsub.f32 %v105, %v107
      %v116 = vand.u32 2147483647, %v114
      %v117 = vand.u32 2147483647, %v115
      %v118 = vmul.f32 %v116, %v112
      %v119 = vmul.f32 %v117, %v113
      %v120 = vand.u32 2147483647, %v104
      %v121 = vand.u32 2147483647, %v105
      %v122 = vadd.f32 %v120, 1e-08
      %v123 = vadd.f32 %v121, 1e-08
      %v124 = vmul.f32 %v118, %v122
      %v125 = vmul.f32 %v119, %v123
      %v126 = vlaneseq
      %v127 = vshrl.u32 %v126, 7
      %v128 = vadd.s32 %v127, 8
      %s129 = ssub.s32 %s67, 0
      %v130 = vstv %s129
      %vm131 = vcmp.lt.s32.totalorder %v127, %v130
      %vm132 = vcmp.lt.s32.totalorder %v128, %v130
      %v133 = vsel %vm131, %v124, 0.0
      %v134 = vsel %vm132, %v125, 0.0
      %v135 = vadd.f32 %v133, %v134
      %v136 = vadd.f32 %v135, 0.0
      %v137 = vadd.f32 %v103, %v136
      %138 = vst [vmem:[#allocation7] sm:$0xff] %v137
    $region29: #{tpu_custom_call.1} parent=1 // pred_fallthru
      _
    // Predicated region
    $region30: #{tpu_custom_call.1} parent=1 // pred_check
      _
    $region31: #{tpu_custom_call.1} parent=1 // pred_check_branch
      %140 = sbr.rel (0) target = $region33
    $region32: #{tpu_custom_call.1} parent=1 // pred_region
      %s142 = ssub.s32 128, 128
      %143 = vsyncadd [#allocation4], %s142
      %s145 = sshll.u32 [#allocation7], 4
      %s146 = int_to_ptr.vmem [resolvable:$true] %s145
      %148 = dma.vmem_to_hbm [thread:$0]  %s146, 128, %s2, [#allocation4]
    $region33: #{tpu_custom_call.1} parent=1 // pred_fallthru
      _
    // Predicated region
    $region34: #{tpu_custom_call.1} parent=1 // pred_check
      _
    $region35: #{tpu_custom_call.1} parent=1 // pred_check_branch
      %150 = sbr.rel (0) target = $region37
    $region36: #{tpu_custom_call.1} parent=1 // pred_region
      %151 = dma.done [#allocation4], 128
    $region37: #{tpu_custom_call.1} parent=1 // pred_fallthru
      _
    %152 = vsyncpa [#allocation3], 1
    %153 = vsyncpa [#allocation6], 1
    %154 = vsyncpa [#allocation4], 1

</llo_original>
